<compile_context>
chip_gen: v7x
topology: tpu7x:2x2x1
jax: 0.10.0
libtpu: 0.0.40
codegen_flags: <defaults>
</compile_context>

<pallas_src>
import functools

import jax
import jax.numpy as jnp
from jax.experimental import pallas as pl
from jax.experimental.pallas import tpu as pltpu

_INV_LN2 = 1.4426950408889634  # 1 / ln(2)


def _entropy_softmax_kernel(x_ref, o_ref, m_acc, z_acc, w_acc, *, n_classes, tc):
    """Online (flash-style) fused softmax-entropy over class tiles.

    Per row accumulate: m = running max, Z = sum(exp(x-m)), W = sum(x*exp(x-m)).
    Finalize:           ent = log(Z) + m - W/Z  ==  -sum(p * log p).
    """
    k = pl.program_id(1)

    @pl.when(k == 0)
    def _():
        m_acc[...] = jnp.full_like(m_acc, -jnp.inf)
        z_acc[...] = jnp.zeros_like(z_acc)
        w_acc[...] = jnp.zeros_like(w_acc)

    x = x_ref[...].astype(jnp.float32)
    ragged = (n_classes % tc) != 0           # static python bool
    if ragged:
        col = jax.lax.broadcasted_iota(jnp.int32, x.shape, 1) + k * tc
        valid = col < n_classes
        xm = jnp.where(valid, x, -jnp.inf)   # masked lanes -> e == 0
        xw = jnp.where(valid, x, 0.0)        # keeps padding out of x*e (0*0 = 0)
    else:
        xm = x
        xw = x

    m_old = m_acc[...]
    m_new = jnp.maximum(m_old, jnp.max(xm, axis=-1, keepdims=True))
    alpha = jnp.exp(m_old - m_new)           # == 0 on the first class block
    e = jnp.exp(xm - m_new)
    z_new = alpha * z_acc[...] + jnp.sum(e, axis=-1, keepdims=True)
    w_new = alpha * w_acc[...] + jnp.sum(xw * e, axis=-1, keepdims=True)
    m_acc[...] = m_new
    z_acc[...] = z_new
    w_acc[...] = w_new

    @pl.when(k == pl.num_programs(1) - 1)
    def _():
        ent = jnp.log(z_new) + m_new - w_new / z_new   # per-row (tm,1) divide only
        o_ref[...] = ent.astype(o_ref.dtype)


def _entropy_plogp_kernel(x_ref, o_ref, acc, *, n_classes, tc):
    """applySoftMax=False path: -sum(x * log2(x), axis=1), tiled over classes."""
    k = pl.program_id(1)

    @pl.when(k == 0)
    def _():
        acc[...] = jnp.zeros_like(acc)

    x = x_ref[...].astype(jnp.float32)
    # TODO(synk): like the PyTorch original, x == 0 yields NaN (0 * -inf); no guard added.
    term = x * (jnp.log(x) * _INV_LN2)
    if (n_classes % tc) != 0:                # static: mask ragged class tail
        col = jax.lax.broadcasted_iota(jnp.int32, x.shape, 1) + k * tc
        term = jnp.where(col < n_classes, term, 0.0)
    acc[...] += jnp.sum(term, axis=-1, keepdims=True)

    @pl.when(k == pl.num_programs(1) - 1)
    def _():
        o_ref[...] = (-acc[...]).astype(o_ref.dtype)


def _pick_tiles(n_rows, n_classes, itemsize):
    """Row/class tile sizes under a conservative per-block VMEM budget."""
    budget = 2 * 1024 * 1024                 # bytes per (tm, tc) input block; with
                                             # 2x pipelining + f32 upcast this stays
                                             # inside v5e's 16 MiB default scoped VMEM
                                             # and v7x's 64 MiB physical VMEM.
    sub = max(8, 32 // max(1, itemsize))     # sublane packing: 8 f32 / 16 bf16 / 32 int8

    if 512 * n_classes * itemsize <= budget:
        tc = n_classes                       # whole class dim fits a ~512-row tile
    else:                                    # vocab-sized C: lane-aligned chunks
        tc = max(128, (budget // (512 * itemsize)) // 128 * 128)
        tc = min(tc, n_classes)

    tm = min(1024, budget // max(1, tc * itemsize))
    tm = max(sub, (tm // sub) * sub)
    if n_rows < tm:
        tm = n_rows                          # single row block (== full dim is legal)
    return tm, tc


def entropy_loss(x, apply_softmax=True, tm=None, tc=None):
    """Pallas implementation of EntropyLoss.forward.  x: (N, C) -> (N,)."""
    n, c = x.shape
    d_tm, d_tc = _pick_tiles(n, c, jnp.dtype(x.dtype).itemsize)
    tm = d_tm if tm is None else tm
    tc = d_tc if tc is None else tc

    if apply_softmax:
        kernel = functools.partial(_entropy_softmax_kernel, n_classes=c, tc=tc)
        scratch = [pltpu.VMEM((tm, 1), jnp.float32)] * 3   # m, Z, sum(x*e)
    else:
        kernel = functools.partial(_entropy_plogp_kernel, n_classes=c, tc=tc)
        scratch = [pltpu.VMEM((tm, 1), jnp.float32)]

    out = pl.pallas_call(
        kernel,
        out_shape=jax.ShapeDtypeStruct((n, 1), x.dtype),
        grid=(pl.cdiv(n, tm), pl.cdiv(c, tc)),   # rows parallel (megacore), classes reduced
        in_specs=[pl.BlockSpec((tm, tc), lambda i, k: (i, k))],
        out_specs=pl.BlockSpec((tm, 1), lambda i, k: (i, 0)),  # resident across k
        scratch_shapes=scratch,
        compiler_params=pltpu.CompilerParams(
            dimension_semantics=("parallel", "arbitrary")),
    )(x)
    return out[:, 0]


def _reference(x, apply_softmax=True):
    if apply_softmax:
        e = jax.nn.softmax(x, axis=1) * jax.nn.log_softmax(x, axis=1)
    else:
        e = x * (jnp.log(x) / jnp.log(2.0))
    return -jnp.sum(e, axis=1)


if __name__ == "__main__":
    key = jax.random.PRNGKey(0)
    k0, k1, k2 = jax.random.split(key, 3)

    # small shapes: batch=8 rows, 16 classes (logits along dim=1)
    x = jax.random.normal(k0, (8, 16), dtype=jnp.float32)

    out = jax.block_until_ready(entropy_loss(x, apply_softmax=True))
    assert out.shape == (8,)
    assert jnp.allclose(out, _reference(x, True), atol=1e-5, rtol=1e-4)

    # applySoftMax=False branch (positive inputs, as in the original usage)
    xp = jax.nn.softmax(x, axis=1)
    out2 = jax.block_until_ready(entropy_loss(xp, apply_softmax=False))
    assert jnp.allclose(out2, _reference(xp, False), atol=1e-5, rtol=1e-4)

    # exercise the C-tiled accumulator path (second grid axis over classes)
    x2 = jax.random.normal(k1, (16, 384), dtype=jnp.float32)
    out3 = jax.block_until_ready(entropy_loss(x2, apply_softmax=True, tc=128))
    assert jnp.allclose(out3, _reference(x2, True), atol=1e-4, rtol=1e-4)

    # ... including a ragged class tail (masked in-kernel)
    x3 = jax.random.normal(k2, (16, 200), dtype=jnp.float32)
    out4 = jax.block_until_ready(entropy_loss(x3, apply_softmax=True, tc=128))
    assert jnp.allclose(out4, _reference(x3, True), atol=1e-4, rtol=1e-4)

    xp3 = jax.nn.softmax(x3, axis=1)
    out5 = jax.block_until_ready(entropy_loss(xp3, apply_softmax=False, tc=128))
    assert jnp.allclose(out5, _reference(xp3, False), atol=1e-4, rtol=1e-4)

    print("KERNEL_OK")
</pallas_src>

<mosaic_0001>
module attributes {stable_mosaic.version = 11 : i64} {
  func.func @_entropy_softmax_kernel(%arg0: i32, %arg1: i32, %arg2: memref<8x16xf32, #tpu.memory_space<vmem>>, %arg3: memref<8x1xf32, #tpu.memory_space<vmem>>, %arg4: memref<8x1xf32, #tpu.memory_space<vmem>>, %arg5: memref<8x1xf32, #tpu.memory_space<vmem>>, %arg6: memref<8x1xf32, #tpu.memory_space<vmem>>) attributes {dimension_semantics = [#tpu.dimension_semantics<parallel>, #tpu.dimension_semantics<arbitrary>], iteration_bounds = array<i64: 1, 1>, scalar_prefetch = 0 : i64, scratch_operands = 3 : i64, tpu.core_type = #tpu.core_type<tc>, window_params = [{transform_indices = @transform_0, window_bounds = array<i64: 8, 16>}, {transform_indices = @transform_1, window_bounds = array<i64: 8, 1>}]} {
    %c0_i32 = arith.constant 0 : i32
    %0 = arith.cmpi eq, %arg1, %c0_i32 : i32
    %1 = arith.extui %0 : i1 to i32
    %c0_i32_0 = arith.constant 0 : i32
    %2 = arith.cmpi ne, %1, %c0_i32_0 : i32
    scf.if %2 {
      %cst_18 = arith.constant 0xFF800000 : f32
      %30 = vector.broadcast %cst_18 : f32 to vector<8x1xf32>
      %c0_19 = arith.constant 0 : index
      %c0_20 = arith.constant 0 : index
      %31 = vector.load %arg4[%c0_19, %c0_20] : memref<8x1xf32, #tpu.memory_space<vmem>>, vector<8x1xf32>
      tpu.vector_store %arg4[%c0_19, %c0_20], %30 {strides = array<i32>} : memref<8x1xf32, #tpu.memory_space<vmem>>, vector<8x1xf32>,
      %cst_21 = arith.constant 0.000000e+00 : f32
      %32 = vector.broadcast %cst_21 : f32 to vector<8x1xf32>
      %c0_22 = arith.constant 0 : index
      %c0_23 = arith.constant 0 : index
      %33 = vector.load %arg5[%c0_22, %c0_23] : memref<8x1xf32, #tpu.memory_space<vmem>>, vector<8x1xf32>
      tpu.vector_store %arg5[%c0_22, %c0_23], %32 {strides = array<i32>} : memref<8x1xf32, #tpu.memory_space<vmem>>, vector<8x1xf32>,
      %cst_24 = arith.constant 0.000000e+00 : f32
      %34 = vector.broadcast %cst_24 : f32 to vector<8x1xf32>
      %c0_25 = arith.constant 0 : index
      %c0_26 = arith.constant 0 : index
      %35 = vector.load %arg6[%c0_25, %c0_26] : memref<8x1xf32, #tpu.memory_space<vmem>>, vector<8x1xf32>
      tpu.vector_store %arg6[%c0_25, %c0_26], %34 {strides = array<i32>} : memref<8x1xf32, #tpu.memory_space<vmem>>, vector<8x1xf32>,
    } else {
    }
    %c0 = arith.constant 0 : index
    %c0_1 = arith.constant 0 : index
    %3 = vector.load %arg2[%c0, %c0_1] : memref<8x16xf32, #tpu.memory_space<vmem>>, vector<8x16xf32>
    %c0_2 = arith.constant 0 : index
    %c0_3 = arith.constant 0 : index
    %4 = vector.load %arg4[%c0_2, %c0_3] : memref<8x1xf32, #tpu.memory_space<vmem>>, vector<8x1xf32>
    %cst = arith.constant dense<0xFF800000> : vector<8xf32>
    %5 = vector.multi_reduction <maximumf>, %3, %cst [1] : vector<8x16xf32> to vector<8xf32>
    %6 = vector.shape_cast %5 : vector<8xf32> to vector<8x1xf32>
    %7 = arith.maximumf %4, %6 : vector<8x1xf32>
    %8 = arith.subf %4, %7 : vector<8x1xf32>
    %9 = math.exp %8 : vector<8x1xf32>
    %10 = vector.broadcast %7 : vector<8x1xf32> to vector<8x16xf32>
    %11 = arith.subf %3, %10 : vector<8x16xf32>
    %12 = math.exp %11 : vector<8x16xf32>
    %c0_4 = arith.constant 0 : index
    %c0_5 = arith.constant 0 : index
    %13 = vector.load %arg5[%c0_4, %c0_5] : memref<8x1xf32, #tpu.memory_space<vmem>>, vector<8x1xf32>
    %14 = arith.mulf %9, %13 : vector<8x1xf32>
    %cst_6 = arith.constant dense<0.000000e+00> : vector<8xf32>
    %15 = vector.multi_reduction <add>, %12, %cst_6 [1] : vector<8x16xf32> to vector<8xf32>
    %16 = vector.shape_cast %15 : vector<8xf32> to vector<8x1xf32>
    %17 = arith.addf %14, %16 : vector<8x1xf32>
    %c0_7 = arith.constant 0 : index
    %c0_8 = arith.constant 0 : index
    %18 = vector.load %arg6[%c0_7, %c0_8] : memref<8x1xf32, #tpu.memory_space<vmem>>, vector<8x1xf32>
    %19 = arith.mulf %9, %18 : vector<8x1xf32>
    %20 = arith.mulf %3, %12 : vector<8x16xf32>
    %cst_9 = arith.constant dense<0.000000e+00> : vector<8xf32>
    %21 = vector.multi_reduction <add>, %20, %cst_9 [1] : vector<8x16xf32> to vector<8xf32>
    %22 = vector.shape_cast %21 : vector<8xf32> to vector<8x1xf32>
    %23 = arith.addf %19, %22 : vector<8x1xf32>
    %c0_10 = arith.constant 0 : index
    %c0_11 = arith.constant 0 : index
    %24 = vector.load %arg4[%c0_10, %c0_11] : memref<8x1xf32, #tpu.memory_space<vmem>>, vector<8x1xf32>
    tpu.vector_store %arg4[%c0_10, %c0_11], %7 {strides = array<i32>} : memref<8x1xf32, #tpu.memory_space<vmem>>, vector<8x1xf32>,
    %c0_12 = arith.constant 0 : index
    %c0_13 = arith.constant 0 : index
    %25 = vector.load %arg5[%c0_12, %c0_13] : memref<8x1xf32, #tpu.memory_space<vmem>>, vector<8x1xf32>
    tpu.vector_store %arg5[%c0_12, %c0_13], %17 {strides = array<i32>} : memref<8x1xf32, #tpu.memory_space<vmem>>, vector<8x1xf32>,
    %c0_14 = arith.constant 0 : index
    %c0_15 = arith.constant 0 : index
    %26 = vector.load %arg6[%c0_14, %c0_15] : memref<8x1xf32, #tpu.memory_space<vmem>>, vector<8x1xf32>
    tpu.vector_store %arg6[%c0_14, %c0_15], %23 {strides = array<i32>} : memref<8x1xf32, #tpu.memory_space<vmem>>, vector<8x1xf32>,
    %c0_i32_16 = arith.constant 0 : i32
    %27 = arith.cmpi eq, %arg1, %c0_i32_16 : i32
    %28 = arith.extui %27 : i1 to i32
    %c0_i32_17 = arith.constant 0 : i32
    %29 = arith.cmpi ne, %28, %c0_i32_17 : i32
    scf.if %29 {
      %30 = math.log %17 : vector<8x1xf32>
      %31 = arith.addf %30, %7 : vector<8x1xf32>
      %32 = arith.divf %23, %17 : vector<8x1xf32>
      %33 = arith.subf %31, %32 : vector<8x1xf32>
      %c0_18 = arith.constant 0 : index
      %c0_19 = arith.constant 0 : index
      %34 = vector.load %arg3[%c0_18, %c0_19] : memref<8x1xf32, #tpu.memory_space<vmem>>, vector<8x1xf32>
      tpu.vector_store %arg3[%c0_18, %c0_19], %33 {strides = array<i32>} : memref<8x1xf32, #tpu.memory_space<vmem>>, vector<8x1xf32>,
    } else {
    }
    return
  }
  func.func @transform_0(%arg0: i32, %arg1: i32) -> (i32, i32) {
    %c0_i32 = arith.constant 0 : i32
    return %arg0, %arg1 : i32, i32
  }
  func.func @transform_1(%arg0: i32, %arg1: i32) -> (i32, i32) {
    %c0_i32 = arith.constant 0 : i32
    %c0_i32_0 = arith.constant 0 : i32
    return %arg0, %c0_i32 : i32, i32
  }
}

</mosaic_0001>

<llo_original>
// kernel: tpu_custom_call.1
$region0: #{tpu_custom_call.1}
  #allocation0 [shape = 'u32[]', space=smem, size = 0x4, offset = 0x4, fixed_abs, tag = 'smem constant byte address 0x4 - core index']
  #allocation1 [shape = 'u32[144,128]{1,0:T(1,128)}', space=vmem, size = 0x12000, scoped, tag = 'internal scratch']
  #allocation2 [shape = 'f32[8,1]{1,0:T(8,128)}', space=vmem, size = 0x1000, scoped, tag = 'scratch operand']
  #allocation3 [shape = 'f32[8,1]{1,0:T(8,128)}', space=vmem, size = 0x1000, scoped, tag = 'scratch operand']
  #allocation4 [shape = 'f32[8,1]{1,0:T(8,128)}', space=vmem, size = 0x1000, scoped, tag = 'scratch operand']
  %s0 = inlined_call_operand.hbm [shape: f32[8,16], index: 0, kind: input, shape index: {}]
  %s1 = inlined_call_operand.vmem [shape: f32[8,1], index: 1, kind: output, shape index: {}]
  %s2 = sld [smem:[#allocation0]]
  $region26: #{tpu_custom_call.1} parent=0
    _
  %s4 = ssub.s32 1, %s2
  %s5 = scalar_select 0, %s4, %s2
  $region1: #{tpu_custom_call.1} parent=0
    #allocation5 [shape = 'u8[4096]{0}', space=vmem, size = 0x1000, scoped, tag = 'input window, operand 0, single buffered']
    #allocation6 [shape = 's32[1]{0}', space=sflag, size = 0x4, scoped, tag = 'scoped memory for tpu_custom_call.1']
    %6 = vsyncpa [#allocation6], 0
    // Predicated region
    $region2: #{tpu_custom_call.1} parent=1 // pred_check
      _
    $region3: #{tpu_custom_call.1} parent=1 // pred_check_branch
      %8 = sbr.rel (0) target = $region5
    $region4: #{tpu_custom_call.1} parent=1 // pred_region
      %s10 = ssub.s32 128, 128
      %11 = vsyncadd [#allocation6], %s10
      %s13 = sshll.u32 [#allocation5], 4
      %s14 = int_to_ptr.vmem [resolvable:$true] %s13
      %16 = dma.hbm_to_vmem [thread:$0]  %s0, 128, %s14, [#allocation6]
    $region5: #{tpu_custom_call.1} parent=1 // pred_fallthru
      _
    // Predicated region
    $region6: #{tpu_custom_call.1} parent=1 // pred_check
      _
    $region7: #{tpu_custom_call.1} parent=1 // pred_check_branch
      %18 = sbr.rel (0) target = $region9
    $region8: #{tpu_custom_call.1} parent=1 // pred_region
      %19 = dma.done [#allocation6], 128
    $region9: #{tpu_custom_call.1} parent=1 // pred_fallthru
      _
    %p20 = scmp.eq.s32.totalorder 0, 0
    // Predicated region
    $region10: #{tpu_custom_call.1} parent=1 // pred_check
      %p21 = pneg %p20
    $region11: #{tpu_custom_call.1} parent=1 // pred_check_branch
      %23 = sbr.rel (%p21) target = $region13
    $region12: #{tpu_custom_call.1} parent=1 // pred_region
      %vm24 = vcmask 7168
      %25 = vst.msk [vmem:[#allocation2] sm:$0xff] %vm24, -inf
      %26 = vst.msk [vmem:[#allocation3] sm:$0xff] %vm24, 0.0
      %27 = vst.msk [vmem:[#allocation4] sm:$0xff] %vm24, 0.0
    $region13: #{tpu_custom_call.1} parent=1 // pred_fallthru
      _
    %v28 = vld [vmem:[#allocation5] sm:$0xff]
    %v29 = vld [vmem:[#allocation2] sm:$0xff]
    %vm30 = vcmask 130048
    %v31 = vsel %vm30, %v28, -inf
    %32 = vmax.xlane.f32.xlu0 %v31
    %v33 = vpop.xlane.xlu0 %32
    %v34 = vmax.f32 %v29, %v33
    %v35 = vsub.f32 %v29, %v34
    %v36 = vmul.f32 %v35, 1.442695
    %v37 = vpow.pop %v36
    %39 = vset.pattern.permute.xlu0 0
    %40 = vperm.xlu0 %39, %v34
    %v41 = vpop.permute.xlu0 %40
    %v43 = vsub.f32 %v28, %v41
    %v44 = vmul.f32 %v43, 1.442695
    %v45 = vpow.pop %v44
    %v46 = vld [vmem:[#allocation3] sm:$0xff]
    %v47 = vmul.f32 %v37, %v46
    %v48 = vsel %vm30, %v45, 0.0
    %49 = vadd.xlane.f32.xlu0 %v48
    %v50 = vpop.xlane.xlu0 %49
    %v51 = vadd.f32 %v47, %v50
    %v52 = vld [vmem:[#allocation4] sm:$0xff]
    %v53 = vmul.f32 %v37, %v52
    %v54 = vmul.f32 %v28, %v45
    %v55 = vsel %vm30, %v54, 0.0
    %56 = vadd.xlane.f32.xlu0 %v55
    %v57 = vpop.xlane.xlu0 %56
    %v58 = vadd.f32 %v53, %v57
    %vm59 = vcmask 7168
    %60 = vst.msk [vmem:[#allocation2] sm:$0xff] %vm59, %v34
    %61 = vst.msk [vmem:[#allocation3] sm:$0xff] %vm59, %v51
    %62 = vst.msk [vmem:[#allocation4] sm:$0xff] %vm59, %v58
    // Predicated region
    $region14: #{tpu_custom_call.1} parent=1 // pred_check
      %p63 = pneg %p20
    $region15: #{tpu_custom_call.1} parent=1 // pred_check_branch
      %65 = sbr.rel (%p63) target = $region17
    $region16: #{tpu_custom_call.1} parent=1 // pred_region
      %v66 = vlog2.pop %v51
      %v67 = vmul.f32 %v66, 0.6931472
      %v68 = vadd.f32 %v67, %v34
      %v69 = vrcp.pop %v51
      %v70 = vmul.f32 %v58, %v69
      %v71 = vsub.f32 %v68, %v70
      %72 = vst.msk [vmem:[%s1] sm:$0xff] %vm59, %v71
    $region17: #{tpu_custom_call.1} parent=1 // pred_fallthru
      _
    // Predicated region
    $region18: #{tpu_custom_call.1} parent=1 // pred_check
      _
    $region19: #{tpu_custom_call.1} parent=1 // pred_check_branch
      %74 = sbr.rel (0) target = $region21
    $region20: #{tpu_custom_call.1} parent=1 // pred_region
      _
    $region21: #{tpu_custom_call.1} parent=1 // pred_fallthru
      _
    // Predicated region
    $region22: #{tpu_custom_call.1} parent=1 // pred_check
      _
    $region23: #{tpu_custom_call.1} parent=1 // pred_check_branch
      %76 = sbr.rel (0) target = $region25
    $region24: #{tpu_custom_call.1} parent=1 // pred_region
      _
    $region25: #{tpu_custom_call.1} parent=1 // pred_fallthru
      _
    %77 = vsyncpa [#allocation6], 1

</llo_original>
